<compile_context>
chip_gen: v7x
topology: tpu7x:2x2x1
jax: 0.10.0
libtpu: 0.0.40
codegen_flags: <defaults>
</compile_context>

<pallas_src>
import functools

import jax
import jax.numpy as jnp
from jax import lax
from jax.experimental import pallas as pl
from jax.experimental.pallas import tpu as pltpu


def _round_up(x, m):
    return ((x + m - 1) // m) * m


# --------------------------------------------------------------------------
# Fused kernel: bias+ReLU on backbone activations -> streaming global-avg-pool
#               (per-sublane partial sums) -> fc + ReLU + Dropout at last step.
# Grid: (batch, m_tiles);  batch "parallel", m_tiles "arbitrary" (reduction).
# --------------------------------------------------------------------------
def _encoder_head_kernel(x_ref, bc_ref, wf_ref, bf_ref, drop_ref, o_ref,
                         acc_ref, *, s_valid, s_pad):
    m = pl.program_id(1)

    @pl.when(m == 0)
    def _init():
        acc_ref[...] = jnp.zeros_like(acc_ref)

    # Backbone activations: upcast bf16 -> f32, fused bias + ReLU (f32 VPU).
    x = x_ref[0].astype(jnp.float32)                                # [tm, C]
    act = jnp.maximum(x + bc_ref[...], 0.0)

    # Per-sublane partial sums: (tm, C) -> (tm//8, 8, C) is a free view of the
    # native (8,128) tiling, the axis-0 reduce is pure VPU adds, and the (8, C)
    # accumulator update is a full-sublane (unmasked) store.
    tm, c = act.shape
    acc_ref[...] += jnp.sum(act.reshape(tm // 8, 8, c), axis=0)     # [8, C]

    @pl.when(m == pl.num_programs(1) - 1)
    def _finalize():
        total = jnp.sum(acc_ref[...], axis=0, keepdims=True)        # [1, C]
        n_pad = s_pad - s_valid
        if n_pad:
            # Padded rows are exact zeros in HBM, so each contributed ReLU(b):
            # subtract the correction once instead of masking every step.
            total = total - float(n_pad) * jnp.maximum(bc_ref[...], 0.0)
        pooled = total * (1.0 / float(s_valid))                     # [1, C]
        # Broadcast to 8 sublanes so the fc matmul and the store are
        # full-sublane and lane-dense (E padded to 128) -> unmasked vst.
        pooled8 = jnp.broadcast_to(pooled, (8, pooled.shape[-1]))
        logits = jnp.dot(pooled8, wf_ref[...],
                         preferred_element_type=jnp.float32) + bf_ref[...]
        feats = jnp.maximum(logits, 0.0) * drop_ref[0]              # inverted Dropout(0.5)
        o_ref[...] = feats[None].astype(o_ref.dtype)                # [1, 8, E_pad]


# --------------------------------------------------------------------------
# Forward-pass wrapper (mirrors EncoderCNN.forward)
# --------------------------------------------------------------------------
def encoder_cnn_forward(images, params, *, training=False, dropout_key=None, tm=None):
    w_conv = params["w_conv"].astype(jnp.float32)    # [C_stem, C_in, 3, 3]
    b_conv = params["b_conv"].astype(jnp.float32)    # [C_stem]
    w_fc = params["w_fc"].astype(jnp.float32)        # [E, C_stem]
    b_fc = params["b_fc"].astype(jnp.float32)        # [E]

    B = images.shape[0]
    C_stem = w_conv.shape[0]
    E = w_fc.shape[0]
    E_pad = _round_up(E, 128)

    # Backbone stand-in: stem conv (3x3, stride 2) via XLA's native conv with
    # NHWC output — image is read once, no im2col-duplicated patches in HBM.
    conv = lax.conv_general_dilated(
        images.astype(jnp.float32), w_conv, window_strides=(2, 2),
        padding="VALID", dimension_numbers=("NCHW", "OIHW", "NHWC"))
    _, OH, OW, _ = conv.shape
    S = OH * OW
    conv = conv.reshape(B, S, C_stem)                               # [B, S, C]

    # M-tile: as large as a ~16 MiB double-buffered bf16 stream budget allows
    # (per-grid-step overhead amortization), multiple of 16 for bf16 packing.
    if tm is None:
        stream_budget = 16 << 20
        tm_cap = max(16, (stream_budget // (2 * C_stem * 2)) // 16 * 16)
        tm = min(tm_cap, 8192, _round_up(S, 16))
    assert tm % 16 == 0
    S_pad = _round_up(S, tm)
    n_m = S_pad // tm

    # Dominant HBM stream in bf16; small weights/biases stay f32 (their traffic
    # is negligible and f32 keeps the elementwise/matmul epilogue accurate).
    conv_bf16 = jnp.pad(conv.astype(jnp.bfloat16),
                        ((0, 0), (0, S_pad - S), (0, 0)))           # [B, S_pad, C]
    b_conv_2d = b_conv.reshape(1, C_stem)
    w_fc_p = jnp.pad(w_fc.T, ((0, 0), (0, E_pad - E)))              # [C, E_pad]
    b_fc_2d = jnp.pad(b_fc, (0, E_pad - E)).reshape(1, E_pad)

    # Dropout(p=0.5) mask precomputed in the wrapper (inverted scaling x2).
    if training:
        if dropout_key is None:
            raise ValueError("training=True requires an explicit dropout_key")
        keep = jax.random.bernoulli(dropout_key, 0.5, (B, 1, E_pad))
        drop_scale = keep.astype(jnp.float32) * 2.0
    else:
        drop_scale = jnp.ones((B, 1, E_pad), jnp.float32)

    # Explicit VMEM budget so the tiling stays portable to v7x (64 MiB phys).
    vmem_needed = (2 * tm * C_stem * 2                 # activation stream, 2 bufs, bf16
                   + 2 * C_stem * E_pad * 4            # fc weights, 2 bufs
                   + 4 * (C_stem + 2 * E_pad) * 4      # biases + dropout scale
                   + 2 * 8 * E_pad * 4                 # output blocks
                   + 8 * C_stem * 4)                   # accumulator scratch
    vmem_limit = min(48 << 20, max(2 * vmem_needed, 32 << 20))

    out_full = pl.pallas_call(
        functools.partial(_encoder_head_kernel, s_valid=S, s_pad=S_pad),
        out_shape=jax.ShapeDtypeStruct((B, 8, E_pad), jnp.float32),
        grid=(B, n_m),
        in_specs=[
            pl.BlockSpec((1, tm, C_stem), lambda b, m: (b, m, 0)),   # activations (bf16)
            pl.BlockSpec((1, C_stem), lambda b, m: (0, 0)),          # conv bias
            pl.BlockSpec((C_stem, E_pad), lambda b, m: (0, 0)),      # fc weights
            pl.BlockSpec((1, E_pad), lambda b, m: (0, 0)),           # fc bias
            pl.BlockSpec((1, 1, E_pad), lambda b, m: (b, 0, 0)),     # dropout scale
        ],
        out_specs=pl.BlockSpec((1, 8, E_pad), lambda b, m: (b, 0, 0)),
        scratch_shapes=[pltpu.VMEM((8, C_stem), jnp.float32)],       # pooled partial sums
        compiler_params=pltpu.CompilerParams(
            dimension_semantics=("parallel", "arbitrary"),
            vmem_limit_bytes=vmem_limit),
    )(conv_bf16, b_conv_2d, w_fc_p, b_fc_2d, drop_scale)

    return out_full[:, 0, :E]


# --------------------------------------------------------------------------
# Pure-JAX f32 reference (eval mode: dropout is identity)
# --------------------------------------------------------------------------
def _reference(images, params):
    conv = lax.conv_general_dilated(
        images.astype(jnp.float32), params["w_conv"].astype(jnp.float32),
        window_strides=(2, 2), padding="VALID",
        dimension_numbers=("NCHW", "OIHW", "NHWC"))
    act = jnp.maximum(conv + params["b_conv"][None, None, None, :], 0.0)
    pooled = act.reshape(images.shape[0], -1, act.shape[-1]).mean(axis=1)
    return jnp.maximum(pooled @ params["w_fc"].T + params["b_fc"][None, :], 0.0)


if __name__ == "__main__":
    key = jax.random.PRNGKey(0)
    k1, k2, k3, k4, k5, k_drop = jax.random.split(key, 6)

    B, C_in, H, W = 2, 3, 32, 32
    C_stem, embed_size = 32, 64
    train_CNN = False  # only affects requires_grad in the PyTorch module, not forward math

    images = jax.random.normal(k1, (B, C_in, H, W), jnp.float32)
    params = {
        "w_conv": 0.1 * jax.random.normal(k2, (C_stem, C_in, 3, 3), jnp.float32),
        "b_conv": 0.1 * jax.random.normal(k3, (C_stem,), jnp.float32),
        "w_fc":   0.1 * jax.random.normal(k4, (embed_size, C_stem), jnp.float32),
        "b_fc":   0.1 * jax.random.normal(k5, (embed_size,), jnp.float32),
    }

    ref = _reference(images, params)

    # Eval mode (Dropout = identity); default tile -> single M step per batch.
    # bf16 activation stream => loosened tolerance vs the all-f32 reference.
    out_eval = jax.block_until_ready(encoder_cnn_forward(images, params, training=False))
    assert out_eval.shape == (B, embed_size)
    assert jnp.allclose(out_eval, ref, atol=2e-2, rtol=2e-2), "mismatch vs reference"

    # Smaller tile -> exercises multi-step accumulation (@pl.when init/finalize)
    # and the padded-row correction with a different pad count.
    out_eval_tiled = jax.block_until_ready(
        encoder_cnn_forward(images, params, training=False, tm=64))
    assert jnp.allclose(out_eval_tiled, out_eval, atol=1e-5, rtol=1e-5), "tiled mismatch"

    # Training mode: Dropout(p=0.5) active; each element is either dropped (0)
    # or the eval value scaled by 2 (inverted dropout).
    out_train = jax.block_until_ready(
        encoder_cnn_forward(images, params, training=True, dropout_key=k_drop))
    assert out_train.shape == (B, embed_size)
    assert bool(jnp.all(jnp.isfinite(out_train)))
    assert bool(jnp.all((out_train == 0.0)
                        | jnp.isclose(out_train, 2.0 * out_eval, atol=1e-5, rtol=1e-5)))

    print("KERNEL_OK")
</pallas_src>

<mosaic_0001>
module attributes {stable_mosaic.version = 11 : i64} {
  func.func @_encoder_head_kernel(%arg0: i32, %arg1: i32, %arg2: memref<1x240x32xbf16, #tpu.memory_space<vmem>>, %arg3: memref<1x32xf32, #tpu.memory_space<vmem>>, %arg4: memref<32x128xf32, #tpu.memory_space<vmem>>, %arg5: memref<1x128xf32, #tpu.memory_space<vmem>>, %arg6: memref<1x1x128xf32, #tpu.memory_space<vmem>>, %arg7: memref<1x8x128xf32, #tpu.memory_space<vmem>>, %arg8: memref<8x32xf32, #tpu.memory_space<vmem>>) attributes {dimension_semantics = [#tpu.dimension_semantics<parallel>, #tpu.dimension_semantics<arbitrary>], iteration_bounds = array<i64: 2, 1>, scalar_prefetch = 0 : i64, scratch_operands = 1 : i64, tpu.core_type = #tpu.core_type<tc>, window_params = [{transform_indices = @transform_0, window_bounds = array<i64: 1, 240, 32>}, {pipeline_mode = #tpu.pipeline_mode<synchronous>, transform_indices = @transform_1, window_bounds = array<i64: 1, 32>}, {pipeline_mode = #tpu.pipeline_mode<synchronous>, transform_indices = @transform_2, window_bounds = array<i64: 32, 128>}, {pipeline_mode = #tpu.pipeline_mode<synchronous>, transform_indices = @transform_3, window_bounds = array<i64: 1, 128>}, {transform_indices = @transform_4, window_bounds = array<i64: 1, 1, 128>}, {transform_indices = @transform_5, window_bounds = array<i64: 1, 8, 128>}]} {
    %c0_i32 = arith.constant 0 : i32
    %0 = arith.cmpi eq, %arg1, %c0_i32 : i32
    %1 = arith.extui %0 : i1 to i32
    %c0_i32_0 = arith.constant 0 : i32
    %2 = arith.cmpi ne, %1, %c0_i32_0 : i32
    scf.if %2 {
      %cst_12 = arith.constant 0.000000e+00 : f32
      %19 = vector.broadcast %cst_12 : f32 to vector<8x32xf32>
      %c0_13 = arith.constant 0 : index
      %c0_14 = arith.constant 0 : index
      %20 = vector.load %arg8[%c0_13, %c0_14] : memref<8x32xf32, #tpu.memory_space<vmem>>, vector<8x32xf32>
      tpu.vector_store %arg8[%c0_13, %c0_14], %19 {strides = array<i32>} : memref<8x32xf32, #tpu.memory_space<vmem>>, vector<8x32xf32>,
    } else {
    }
    %c0 = arith.constant 0 : index
    %c0_1 = arith.constant 0 : index
    %c0_2 = arith.constant 0 : index
    %3 = vector.load %arg2[%c0, %c0_1, %c0_2] : memref<1x240x32xbf16, #tpu.memory_space<vmem>>, vector<1x240x32xbf16>
    %4 = vector.shape_cast %3 : vector<1x240x32xbf16> to vector<240x32xbf16>
    %5 = arith.extf %4 : vector<240x32xbf16> to vector<240x32xf32>
    %c0_3 = arith.constant 0 : index
    %c0_4 = arith.constant 0 : index
    %6 = vector.load %arg3[%c0_3, %c0_4] : memref<1x32xf32, #tpu.memory_space<vmem>>, vector<1x32xf32>
    %7 = vector.broadcast %6 : vector<1x32xf32> to vector<240x32xf32>
    %8 = arith.addf %5, %7 : vector<240x32xf32>
    %cst = arith.constant 0.000000e+00 : f32
    %9 = vector.broadcast %cst : f32 to vector<240x32xf32>
    %10 = arith.maximumf %8, %9 : vector<240x32xf32>
    %c0_5 = arith.constant 0 : index
    %c0_6 = arith.constant 0 : index
    %11 = vector.load %arg8[%c0_5, %c0_6] : memref<8x32xf32, #tpu.memory_space<vmem>>, vector<8x32xf32>
    %12 = vector.shape_cast %10 : vector<240x32xf32> to vector<30x8x32xf32>
    %cst_7 = arith.constant dense<0.000000e+00> : vector<8x32xf32>
    %13 = vector.multi_reduction <add>, %12, %cst_7 [0] : vector<30x8x32xf32> to vector<8x32xf32>
    %14 = arith.addf %11, %13 : vector<8x32xf32>
    %c0_8 = arith.constant 0 : index
    %c0_9 = arith.constant 0 : index
    %15 = vector.load %arg8[%c0_8, %c0_9] : memref<8x32xf32, #tpu.memory_space<vmem>>, vector<8x32xf32>
    tpu.vector_store %arg8[%c0_8, %c0_9], %14 {strides = array<i32>} : memref<8x32xf32, #tpu.memory_space<vmem>>, vector<8x32xf32>,
    %c0_i32_10 = arith.constant 0 : i32
    %16 = arith.cmpi eq, %arg1, %c0_i32_10 : i32
    %17 = arith.extui %16 : i1 to i32
    %c0_i32_11 = arith.constant 0 : i32
    %18 = arith.cmpi ne, %17, %c0_i32_11 : i32
    scf.if %18 {
      %c0_12 = arith.constant 0 : index
      %c0_13 = arith.constant 0 : index
      %19 = vector.load %arg8[%c0_12, %c0_13] : memref<8x32xf32, #tpu.memory_space<vmem>>, vector<8x32xf32>
      %cst_14 = arith.constant dense<0.000000e+00> : vector<32xf32>
      %20 = vector.multi_reduction <add>, %19, %cst_14 [0] : vector<8x32xf32> to vector<32xf32>
      %21 = vector.shape_cast %20 : vector<32xf32> to vector<1x32xf32>
      %c0_15 = arith.constant 0 : index
      %c0_16 = arith.constant 0 : index
      %22 = vector.load %arg3[%c0_15, %c0_16] : memref<1x32xf32, #tpu.memory_space<vmem>>, vector<1x32xf32>
      %cst_17 = arith.constant 0.000000e+00 : f32
      %23 = vector.broadcast %cst_17 : f32 to vector<1x32xf32>
      %24 = arith.maximumf %22, %23 : vector<1x32xf32>
      %cst_18 = arith.constant 1.500000e+01 : f32
      %25 = vector.broadcast %cst_18 : f32 to vector<1x32xf32>
      %26 = arith.mulf %25, %24 : vector<1x32xf32>
      %27 = arith.subf %21, %26 : vector<1x32xf32>
      %cst_19 = arith.constant 0.00444444455 : f32
      %28 = vector.broadcast %cst_19 : f32 to vector<1x32xf32>
      %29 = arith.mulf %27, %28 : vector<1x32xf32>
      %30 = vector.shape_cast %29 : vector<1x32xf32> to vector<1x32xf32>
      %31 = vector.broadcast %30 : vector<1x32xf32> to vector<8x32xf32>
      %c0_20 = arith.constant 0 : index
      %c0_21 = arith.constant 0 : index
      %32 = vector.load %arg4[%c0_20, %c0_21] : memref<32x128xf32, #tpu.memory_space<vmem>>, vector<32x128xf32>
      %cst_22 = arith.constant dense<0.000000e+00> : vector<8x128xf32>
      %33 = tpu.matmul %31, %32, %cst_22 {dimension_numbers = #tpu.dot_dimension_numbers<[1], [0], [0], [1], [0, 0, 1, 1], [], []>} : vector<8x32xf32>, vector<32x128xf32>, vector<8x128xf32> -> vector<8x128xf32>
      %c0_23 = arith.constant 0 : index
      %c0_24 = arith.constant 0 : index
      %34 = vector.load %arg5[%c0_23, %c0_24] : memref<1x128xf32, #tpu.memory_space<vmem>>, vector<1x128xf32>
      %35 = vector.broadcast %34 : vector<1x128xf32> to vector<8x128xf32>
      %36 = arith.addf %33, %35 : vector<8x128xf32>
      %cst_25 = arith.constant 0.000000e+00 : f32
      %37 = vector.broadcast %cst_25 : f32 to vector<8x128xf32>
      %38 = arith.maximumf %36, %37 : vector<8x128xf32>
      %c0_26 = arith.constant 0 : index
      %c0_27 = arith.constant 0 : index
      %c0_28 = arith.constant 0 : index
      %39 = vector.load %arg6[%c0_26, %c0_27, %c0_28] : memref<1x1x128xf32, #tpu.memory_space<vmem>>, vector<1x1x128xf32>
      %40 = vector.shape_cast %39 : vector<1x1x128xf32> to vector<1x128xf32>
      %41 = vector.broadcast %40 : vector<1x128xf32> to vector<8x128xf32>
      %42 = arith.mulf %38, %41 : vector<8x128xf32>
      %43 = vector.shape_cast %42 : vector<8x128xf32> to vector<1x8x128xf32>
      %c0_29 = arith.constant 0 : index
      %c0_30 = arith.constant 0 : index
      %c0_31 = arith.constant 0 : index
      %44 = vector.load %arg7[%c0_29, %c0_30, %c0_31] : memref<1x8x128xf32, #tpu.memory_space<vmem>>, vector<1x8x128xf32>
      tpu.vector_store %arg7[%c0_29, %c0_30, %c0_31], %43 {strides = array<i32>} : memref<1x8x128xf32, #tpu.memory_space<vmem>>, vector<1x8x128xf32>,
    } else {
    }
    return
  }
  func.func @transform_0(%arg0: i32, %arg1: i32) -> (i32, i32, i32) {
    %c0_i32 = arith.constant 0 : i32
    %c0_i32_0 = arith.constant 0 : i32
    return %arg0, %arg1, %c0_i32 : i32, i32, i32
  }
  func.func @transform_1(%arg0: i32, %arg1: i32) -> (i32, i32) {
    %c0_i32 = arith.constant 0 : i32
    %c0_i32_0 = arith.constant 0 : i32
    %c0_i32_1 = arith.constant 0 : i32
    return %c0_i32, %c0_i32_0 : i32, i32
  }
  func.func @transform_2(%arg0: i32, %arg1: i32) -> (i32, i32) {
    %c0_i32 = arith.constant 0 : i32
    %c0_i32_0 = arith.constant 0 : i32
    %c0_i32_1 = arith.constant 0 : i32
    return %c0_i32, %c0_i32_0 : i32, i32
  }
  func.func @transform_3(%arg0: i32, %arg1: i32) -> (i32, i32) {
    %c0_i32 = arith.constant 0 : i32
    %c0_i32_0 = arith.constant 0 : i32
    %c0_i32_1 = arith.constant 0 : i32
    return %c0_i32, %c0_i32_0 : i32, i32
  }
  func.func @transform_4(%arg0: i32, %arg1: i32) -> (i32, i32, i32) {
    %c0_i32 = arith.constant 0 : i32
    %c0_i32_0 = arith.constant 0 : i32
    %c0_i32_1 = arith.constant 0 : i32
    return %arg0, %c0_i32, %c0_i32_0 : i32, i32, i32
  }
  func.func @transform_5(%arg0: i32, %arg1: i32) -> (i32, i32, i32) {
    %c0_i32 = arith.constant 0 : i32
    %c0_i32_0 = arith.constant 0 : i32
    %c0_i32_1 = arith.constant 0 : i32
    return %arg0, %c0_i32, %c0_i32_0 : i32, i32, i32
  }
}

</mosaic_0001>

<llo_original>
// kernel: tpu_custom_call.1
$region0: #{tpu_custom_call.1}
  #allocation0 [shape = 'u32[]', space=smem, size = 0x4, offset = 0x4, fixed_abs, tag = 'smem constant byte address 0x4 - core index']
  #allocation1 [shape = 'u32[144,128]{1,0:T(1,128)}', space=vmem, size = 0x12000, scoped, tag = 'internal scratch']
  #allocation2 [shape = 'f32[8,32]{1,0:T(8,128)}', space=vmem, size = 0x1000, scoped, tag = 'scratch operand']
  %s0 = inlined_call_operand.vmem [shape: bf16[2,240,32], index: 0, kind: input, shape index: {}]
  %s1 = inlined_call_operand.vmem [shape: f32[1,32], index: 1, kind: input, shape index: {}]
  %s2 = inlined_call_operand.vmem [shape: f32[32,128], index: 2, kind: input, shape index: {}]
  %s3 = inlined_call_operand.vmem [shape: f32[1,128], index: 3, kind: input, shape index: {}]
  %s4 = inlined_call_operand.vmem [shape: f32[2,1,128], index: 4, kind: input, shape index: {}]
  %s5 = inlined_call_operand.hbm [shape: f32[2,8,128], index: 5, kind: output, shape index: {}]
  %s6 = sld [smem:[#allocation0]]
  $region61: #{tpu_custom_call.1} parent=0
    _
  %s8 = ssub.s32 1, %s6
  %s9 = scalar_select 0, %s8, %s6
  $region1: #{tpu_custom_call.1} parent=0
    #allocation3 [shape = 'u8[8192]{0}', space=vmem, size = 0x2000, scoped, tag = 'output window, operand 0']
    #allocation4 [shape = 's32[2]{0}', space=sflag, size = 0x8, scoped, tag = 'scoped memory for tpu_custom_call.1']
    %10 = vsyncpa [#allocation4], 0
    %s11 = scalar_lea.sflag [#allocation4], 1
    %12 = vsyncpa %s11, 0
    loop: start=0, step=1, limit=4
    $region2: #{tpu_custom_call.1} parent=1 // loop_pre_header
      _
    $region3: #{tpu_custom_call.1} parent=1 // loop_header
      %s14 = sphi 0, %s18
      %p15 = scmp.ge.s32.totalorder %s14, 4
      %s21 = sphi 0, %s33
      %s22 = sphi 0, %s29
      %s23 = sphi 0, %s21
      %s24 = sphi 0, %s22
      %s25 = sphi 0, %s23
      %s26 = sphi 0, %s24
      %s38 = sphi 0, %s40
      %s41 = sphi 0, %s38
      %s42 = sphi 0, %s41
      %s58 = sphi 0, %s42
      %s62 = sphi 0, %s62
      %s64 = sphi 0, %s62
      %s65 = sphi 0, %s64
      %s79 = sphi 0, %s65
      %s83 = sphi 0, %s83
      %s85 = sphi 0, %s83
      %s86 = sphi 0, %s85
      %s100 = sphi 0, %s86
      %s104 = sphi 0, %s104
      %s106 = sphi 0, %s104
      %s107 = sphi 0, %s106
      %s121 = sphi 0, %s107
      %s127 = sphi 0, %s129
      %s130 = sphi 0, %s127
      %s131 = sphi 0, %s130
      %s147 = sphi 0, %s131
      %s153 = sphi 0, %s155
      %s156 = sphi 0, %s153
      %s157 = sphi 0, %s156
      %s173 = sphi 0, %s157
    $region4: #{tpu_custom_call.1} parent=1 // loop_header_branch
      %17 = sbr.rel (%p15) target = $region8
    $region5: #{tpu_custom_call.1} parent=1 // loop_body
      %s19 = ssub.s32 %s14, 1
      %s20 = ssub.s32 %s14, 2
      %s27 = sadd.s32 1, %s22
      %p28 = scmp.ge.s32.totalorder %s27, 1
      %s29 = scalar_select %p28, 0, %s27
      %s30 = sadd.s32 1, %s21
      %s31 = scalar_select %p28, %s30, %s21
      %p32 = scmp.ge.s32.totalorder %s31, 2
      %s33 = scalar_select %p32, 0, %s31
      %s34 = ssub.s32 %s21, %s33
      %s35 = ssub.s32 %s22, %s29
      %s36 = sor.u32 %s34, %s35
      %p37 = scmp.eq.s32.totalorder %s36, 0
      %s39 = sadd.s32 %s38, 1
      %s40 = scalar_select %p37, %s38, %s39
      %p43 = pneg %p37
      %p44 = scmp.eq.s32.totalorder %s14, 1
      %p45 = por %p43, %p44
      %p46 = scmp.ne.s32.totalorder %s38, %s41
      %p47 = scmp.eq.s32.totalorder %s14, 0
      %p48 = por %p46, %p47
      %p49 = scmp.ne.s32.totalorder %s38, %s41
      %p50 = scmp.eq.s32.totalorder %s19, 1
      %p51 = por %p49, %p50
      %p52 = scmp.ne.s32.totalorder %s41, %s42
      %p53 = scmp.eq.s32.totalorder %s19, 0
      %p54 = por %p52, %p53
      %p55 = scmp.ne.s32.totalorder %s41, %s42
      %p56 = scmp.eq.s32.totalorder %s20, 1
      %p57 = por %p55, %p56
      %p59 = scmp.ne.s32.totalorder %s42, %s58
      %p60 = scmp.eq.s32.totalorder %s20, 0
      %p61 = por %p59, %p60
      %s63 = sadd.s32 %s62, 1
      %p66 = scmp.eq.s32.totalorder %s14, 1
      %p67 = scmp.ne.s32.totalorder %s62, %s64
      %p68 = scmp.eq.s32.totalorder %s14, 0
      %p69 = por %p67, %p68
      %p70 = scmp.ne.s32.totalorder %s62, %s64
      %p71 = scmp.eq.s32.totalorder %s19, 1
      %p72 = por %p70, %p71
      %p73 = scmp.ne.s32.totalorder %s64, %s65
      %p74 = scmp.eq.s32.totalorder %s19, 0
      %p75 = por %p73, %p74
      %p76 = scmp.ne.s32.totalorder %s64, %s65
      %p77 = scmp.eq.s32.totalorder %s20, 1
      %p78 = por %p76, %p77
      %p80 = scmp.ne.s32.totalorder %s65, %s79
      %p81 = scmp.eq.s32.totalorder %s20, 0
      %p82 = por %p80, %p81
      %s84 = sadd.s32 %s83, 1
      %p87 = scmp.eq.s32.totalorder %s14, 1
      %p88 = scmp.ne.s32.totalorder %s83, %s85
      %p89 = scmp.eq.s32.totalorder %s14, 0
      %p90 = por %p88, %p89
      %p91 = scmp.ne.s32.totalorder %s83, %s85
      %p92 = scmp.eq.s32.totalorder %s19, 1
      %p93 = por %p91, %p92
      %p94 = scmp.ne.s32.totalorder %s85, %s86
      %p95 = scmp.eq.s32.totalorder %s19, 0
      %p96 = por %p94, %p95
      %p97 = scmp.ne.s32.totalorder %s85, %s86
      %p98 = scmp.eq.s32.totalorder %s20, 1
      %p99 = por %p97, %p98
      %p101 = scmp.ne.s32.totalorder %s86, %s100
      %p102 = scmp.eq.s32.totalorder %s20, 0
      %p103 = por %p101, %p102
      %s105 = sadd.s32 %s104, 1
      %p108 = scmp.eq.s32.totalorder %s14, 1
      %p109 = scmp.ne.s32.totalorder %s104, %s106
      %p110 = scmp.eq.s32.totalorder %s14, 0
      %p111 = por %p109, %p110
      %p112 = scmp.ne.s32.totalorder %s104, %s106
      %p113 = scmp.eq.s32.totalorder %s19, 1
      %p114 = por %p112, %p113
      %p115 = scmp.ne.s32.totalorder %s106, %s107
      %p116 = scmp.eq.s32.totalorder %s19, 0
      %p117 = por %p115, %p116
      %p118 = scmp.ne.s32.totalorder %s106, %s107
      %p119 = scmp.eq.s32.totalorder %s20, 1
      %p120 = por %p118, %p119
      %p122 = scmp.ne.s32.totalorder %s107, %s121
      %p123 = scmp.eq.s32.totalorder %s20, 0
      %p124 = por %p122, %p123
      %s125 = ssub.s32 %s21, %s33
      %p126 = scmp.eq.s32.totalorder %s125, 0
      %s128 = sadd.s32 %s127, 1
      %s129 = scalar_select %p126, %s127, %s128
      %p132 = pneg %p126
      %p133 = scmp.eq.s32.totalorder %s14, 1
      %p134 = por %p132, %p133
      %p135 = scmp.ne.s32.totalorder %s127, %s130
      %p136 = scmp.eq.s32.totalorder %s14, 0
      %p137 = por %p135, %p136
      %p138 = scmp.ne.s32.totalorder %s127, %s130
      %p139 = scmp.eq.s32.totalorder %s19, 1
      %p140 = por %p138, %p139
      %p141 = scmp.ne.s32.totalorder %s130, %s131
      %p142 = scmp.eq.s32.totalorder %s19, 0
      %p143 = por %p141, %p142
      %p144 = scmp.ne.s32.totalorder %s130, %s131
      %p145 = scmp.eq.s32.totalorder %s20, 1
      %p146 = por %p144, %p145
      %p148 = scmp.ne.s32.totalorder %s131, %s147
      %p149 = scmp.eq.s32.totalorder %s20, 0
      %p150 = por %p148, %p149
      %s151 = ssub.s32 %s21, %s33
      %p152 = scmp.eq.s32.totalorder %s151, 0
      %s154 = sadd.s32 %s153, 1
      %s155 = scalar_select %p152, %s153, %s154
      %p158 = pneg %p152
      %p159 = scmp.eq.s32.totalorder %s14, 1
      %p160 = por %p158, %p159
      %p161 = scmp.ne.s32.totalorder %s153, %s156
      %p162 = scmp.eq.s32.totalorder %s14, 0
      %p163 = por %p161, %p162
      %p164 = scmp.ne.s32.totalorder %s153, %s156
      %p165 = scmp.eq.s32.totalorder %s19, 1
      %p166 = por %p164, %p165
      %p167 = scmp.ne.s32.totalorder %s156, %s157
      %p168 = scmp.eq.s32.totalorder %s19, 0
      %p169 = por %p167, %p168
      %p170 = scmp.ne.s32.totalorder %s156, %s157
      %p171 = scmp.eq.s32.totalorder %s20, 1
      %p172 = por %p170, %p171
      %p174 = scmp.ne.s32.totalorder %s157, %s173
      %p175 = scmp.eq.s32.totalorder %s20, 0
      %p176 = por %p174, %p175
      %p177 = scmp.le.s32.totalorder 1, %s14
      %p178 = scmp.lt.s32.totalorder %s14, 3
      %p179 = pnand %p177, %p178
      %p180 = pneg %p179
      // Predicated region
      $region9: #{tpu_custom_call.1} parent=5 // pred_check
        _
      $region10: #{tpu_custom_call.1} parent=5 // pred_check_branch
        %182 = sbr.rel (%p179) target = $region12
      $region11: #{tpu_custom_call.1} parent=5 // pred_region
        %s183 = ssub.s32 %s14, 1
        // Predicated region
        $region13: #{tpu_custom_call.1} parent=11 // pred_check
          %p184 = pneg %p75
        $region14: #{tpu_custom_call.1} parent=11 // pred_check_branch
          %186 = sbr.rel (%p184) target = $region16
        $region15: #{tpu_custom_call.1} parent=11 // pred_region
          _
        $region16: #{tpu_custom_call.1} parent=11 // pred_fallthru
          _
        // Predicated region
        $region17: #{tpu_custom_call.1} parent=11 // pred_check
          %p187 = pneg %p96
        $region18: #{tpu_custom_call.1} parent=11 // pred_check_branch
          %189 = sbr.rel (%p187) target = $region20
        $region19: #{tpu_custom_call.1} parent=11 // pred_region
          _
        $region20: #{tpu_custom_call.1} parent=11 // pred_fallthru
          _
        // Predicated region
        $region21: #{tpu_custom_call.1} parent=11 // pred_check
          %p190 = pneg %p117
        $region22: #{tpu_custom_call.1} parent=11 // pred_check_branch
          %192 = sbr.rel (%p190) target = $region24
        $region23: #{tpu_custom_call.1} parent=11 // pred_region
          _
        $region24: #{tpu_custom_call.1} parent=11 // pred_fallthru
          _
      $region12: #{tpu_custom_call.1} parent=5 // pred_fallthru
        _
      %p193 = scmp.lt.s32.totalorder %s14, 2
      // Predicated region
      $region25: #{tpu_custom_call.1} parent=5 // pred_check
        %p194 = pneg %p193
      $region26: #{tpu_custom_call.1} parent=5 // pred_check_branch
        %196 = sbr.rel (%p194) target = $region28
      $region27: #{tpu_custom_call.1} parent=5 // pred_region
        // Predicated region
        $region29: #{tpu_custom_call.1} parent=27 // pred_check
          %p197 = pneg %p48
        $region30: #{tpu_custom_call.1} parent=27 // pred_check_branch
          %199 = sbr.rel (%p197) target = $region32
        $region31: #{tpu_custom_call.1} parent=27 // pred_region
          %s200 = smul.u32 30, %s22
          %p201 = scmp.lt.s32.totalorder %s21, 1
          %s202 = scalar_select %p201, %s21, 1
          %p203 = scmp.lt.s32.totalorder %s200, 29
          %s204 = scalar_select %p203, %s200, 29
          %s205 = smul.addr %s202, 30
          %s206 = sadd.s32 %s204, %s205
          %s207 = smul.addr %s206, 4
          %s208 = scalar_lea.vmem %s0, %s207
          %s209 = smul.u32 30, %s22
        $region32: #{tpu_custom_call.1} parent=27 // pred_fallthru
          _
        // Predicated region
        $region33: #{tpu_custom_call.1} parent=27 // pred_check
          %p210 = pneg %p137
        $region34: #{tpu_custom_call.1} parent=27 // pred_check_branch
          %212 = sbr.rel (%p210) target = $region36
        $region35: #{tpu_custom_call.1} parent=27 // pred_region
          %p213 = scmp.lt.s32.totalorder %s21, 1
          %s214 = scalar_select %p213, %s21, 1
          %s215 = scalar_lea.vmem %s4, %s214
        $region36: #{tpu_custom_call.1} parent=27 // pred_fallthru
          _
      $region28: #{tpu_custom_call.1} parent=5 // pred_fallthru
        _
      %p216 = scmp.le.s32.totalorder 1, %s14
      %p217 = scmp.lt.s32.totalorder %s14, 3
      %p218 = pnand %p216, %p217
      %p219 = pneg %p218
      // Predicated region
      $region37: #{tpu_custom_call.1} parent=5 // pred_check
        _
      $region38: #{tpu_custom_call.1} parent=5 // pred_check_branch
        %221 = sbr.rel (%p218) target = $region40
      $region39: #{tpu_custom_call.1} parent=5 // pred_region
        %s222 = ssub.s32 %s14, 1
        %s223 = smul.u32 30, %s24
        %p224 = scmp.lt.s32.totalorder %s23, 1
        %s225 = scalar_select %p224, %s23, 1
        %p226 = scmp.lt.s32.totalorder %s223, 29
        %s227 = scalar_select %p226, %s223, 29
        %s228 = smul.addr %s225, 30
        %s229 = sadd.s32 %s227, %s228
        %s230 = smul.addr %s229, 4
        %s231 = scalar_lea.vmem %s0, %s230
        %p232 = pneg %p54
        %p233 = pneg %p51
        %p234 = pneg %p75
        %p235 = pneg %p72
        %p236 = pneg %p96
        %p237 = pneg %p93
        %p238 = pneg %p117
        %p239 = pneg %p114
        %p240 = scmp.lt.s32.totalorder %s23, 1
        %s241 = scalar_select %p240, %s23, 1
        %s242 = scalar_lea.vmem %s4, %s241
        %p243 = pneg %p143
        %p244 = pneg %p140
        %p245 = pneg %p169
        %p246 = pneg %p166
        %s247 = sand.u32 %s156, 1
        %s248 = scalar_lea.sflag [#allocation4], %s247
        %s249 = sand.u32 %s156, 1
        %s250 = smul.addr %s249, 8
        %s251 = scalar_lea.vmem [#allocation3], %s250
        %s252 = smul.u32 30, %s24
        %p253 = scmp.lt.s32.totalorder %s23, 1
        %s254 = scalar_select %p253, %s23, 1
        %p255 = scmp.lt.s32.totalorder %s252, 29
        %s256 = scalar_select %p255, %s252, 29
        %s257 = smul.addr %s254, 30
        %s258 = sadd.s32 %s256, %s257
        %s259 = smul.addr %s258, 4
        %s260 = scalar_lea.vmem %s0, %s259
        %s261 = smul.u32 30, %s24
        %p262 = scmp.lt.s32.totalorder %s23, 1
        %s263 = scalar_select %p262, %s23, 1
        %s264 = scalar_lea.vmem %s4, %s263
        %p265 = scmp.eq.s32.totalorder %s24, 0
        // Predicated region
        $region41: #{tpu_custom_call.1} parent=39 // pred_check
          %p266 = pneg %p265
        $region42: #{tpu_custom_call.1} parent=39 // pred_check_branch
          %268 = sbr.rel (%p266) target = $region44
        $region43: #{tpu_custom_call.1} parent=39 // pred_region
          %vm269 = vcmask 261120
          %270 = vst.msk [vmem:[#allocation2] sm:$0xff] %vm269, 0.0
        $region44: #{tpu_custom_call.1} parent=39 // pred_fallthru
          _
        %v271 = vld [vmem:[%s260] sm:$0xf]
        %v272 = vld [vmem:[%s260 + $0x4] sm:$0xf]
        %v273 = vld [vmem:[%s260 + $0x8] sm:$0xf]
        %v274 = vld [vmem:[%s260 + $0xc] sm:$0xf]
        %v275 = vld [vmem:[%s260 + $0x10] sm:$0xf]
        %v276 = vld [vmem:[%s260 + $0x14] sm:$0xf]
        %v277 = vld [vmem:[%s260 + $0x18] sm:$0xf]
        %v278 = vld [vmem:[%s260 + $0x1c] sm:$0xf]
        %v279 = vld [vmem:[%s260 + $0x20] sm:$0xf]
        %v280 = vld [vmem:[%s260 + $0x24] sm:$0xf]
        %v281 = vld [vmem:[%s260 + $0x28] sm:$0xf]
        %v282 = vld [vmem:[%s260 + $0x2c] sm:$0xf]
        %v283 = vld [vmem:[%s260 + $0x30] sm:$0xf]
        %v284 = vld [vmem:[%s260 + $0x34] sm:$0xf]
        %v285 = vld [vmem:[%s260 + $0x38] sm:$0xf]
        %v286 = vld [vmem:[%s260 + $0x3c] sm:$0xf]
        %v287 = vld [vmem:[%s260 + $0x40] sm:$0xf]
        %v288 = vld [vmem:[%s260 + $0x44] sm:$0xf]
        %v289 = vld [vmem:[%s260 + $0x48] sm:$0xf]
        %v290 = vld [vmem:[%s260 + $0x4c] sm:$0xf]
        %v291 = vld [vmem:[%s260 + $0x50] sm:$0xf]
        %v292 = vld [vmem:[%s260 + $0x54] sm:$0xf]
        %v293 = vld [vmem:[%s260 + $0x58] sm:$0xf]
        %v294 = vld [vmem:[%s260 + $0x5c] sm:$0xf]
        %v295 = vld [vmem:[%s260 + $0x60] sm:$0xf]
        %v296 = vld [vmem:[%s260 + $0x64] sm:$0xf]
        %v297 = vld [vmem:[%s260 + $0x68] sm:$0xf]
        %v298 = vld [vmem:[%s260 + $0x6c] sm:$0xf]
        %v299 = vld [vmem:[%s260 + $0x70] sm:$0xf]
        %v300 = vld [vmem:[%s260 + $0x74] sm:$0xf]
        %v301 = vunpack.c.l.bf16 %v271
        %v302 = vunpack.c.l.bf16 %v272
        %v303 = vunpack.c.l.bf16 %v273
        %v304 = vunpack.c.l.bf16 %v274
        %v305 = vunpack.c.l.bf16 %v275
        %v306 = vunpack.c.l.bf16 %v276
        %v307 = vunpack.c.l.bf16 %v277
        %v308 = vunpack.c.l.bf16 %v278
        %v309 = vunpack.c.l.bf16 %v279
        %v310 = vunpack.c.l.bf16 %v280
        %v311 = vunpack.c.l.bf16 %v281
        %v312 = vunpack.c.l.bf16 %v282
        %v313 = vunpack.c.l.bf16 %v283
        %v314 = vunpack.c.l.bf16 %v284
        %v315 = vunpack.c.l.bf16 %v285
        %v316 = vunpack.c.l.bf16 %v286
        %v317 = vunpack.c.l.bf16 %v287
        %v318 = vunpack.c.l.bf16 %v288
        %v319 = vunpack.c.l.bf16 %v289
        %v320 = vunpack.c.l.bf16 %v290
        %v321 = vunpack.c.l.bf16 %v291
        %v322 = vunpack.c.l.bf16 %v292
        %v323 = vunpack.c.l.bf16 %v293
        %v324 = vunpack.c.l.bf16 %v294
        %v325 = vunpack.c.l.bf16 %v295
        %v326 = vunpack.c.l.bf16 %v296
        %v327 = vunpack.c.l.bf16 %v297
        %v328 = vunpack.c.l.bf16 %v298
        %v329 = vunpack.c.l.bf16 %v299
        %v330 = vunpack.c.l.bf16 %v300
        %v331 = vld [vmem:[%s1] sm:$0x1]
        %v333 = vlaneseq
        %v334 = vshrl.u32 %v333, 7
        %v335 = vsub.s32 0, %v334
        %v336 = vrot.slane %v331, %v335
        %v338 = vadd.f32 %v301, %v336
        %v339 = vadd.f32 %v302, %v336
        %v340 = vadd.f32 %v303, %v336
        %v341 = vadd.f32 %v304, %v336
        %v342 = vadd.f32 %v305, %v336
        %v343 = vadd.f32 %v306, %v336
        %v344 = vadd.f32 %v307, %v336
        %v345 = vadd.f32 %v308, %v336
        %v346 = vadd.f32 %v309, %v336
        %v347 = vadd.f32 %v310, %v336
        %v348 = vadd.f32 %v311, %v336
        %v349 = vadd.f32 %v312, %v336
        %v350 = vadd.f32 %v313, %v336
        %v351 = vadd.f32 %v314, %v336
        %v352 = vadd.f32 %v315, %v336
        %v353 = vadd.f32 %v316, %v336
        %v354 = vadd.f32 %v317, %v336
        %v355 = vadd.f32 %v318, %v336
        %v356 = vadd.f32 %v319, %v336
        %v357 = vadd.f32 %v320, %v336
        %v358 = vadd.f32 %v321, %v336
        %v359 = vadd.f32 %v322, %v336
        %v360 = vadd.f32 %v323, %v336
        %v361 = vadd.f32 %v324, %v336
        %v362 = vadd.f32 %v325, %v336
        %v363 = vadd.f32 %v326, %v336
        %v364 = vadd.f32 %v327, %v336
        %v365 = vadd.f32 %v328, %v336
        %v366 = vadd.f32 %v329, %v336
        %v367 = vadd.f32 %v330, %v336
        %v368 = vmax.f32 %v338, 0.0
        %v369 = vmax.f32 %v339, 0.0
        %v370 = vmax.f32 %v340, 0.0
        %v371 = vmax.f32 %v341, 0.0
        %v372 = vmax.f32 %v342, 0.0
        %v373 = vmax.f32 %v343, 0.0
        %v374 = vmax.f32 %v344, 0.0
        %v375 = vmax.f32 %v345, 0.0
        %v376 = vmax.f32 %v346, 0.0
        %v377 = vmax.f32 %v347, 0.0
        %v378 = vmax.f32 %v348, 0.0
        %v379 = vmax.f32 %v349, 0.0
        %v380 = vmax.f32 %v350, 0.0
        %v381 = vmax.f32 %v351, 0.0
        %v382 = vmax.f32 %v352, 0.0
        %v383 = vmax.f32 %v353, 0.0
        %v384 = vmax.f32 %v354, 0.0
        %v385 = vmax.f32 %v355, 0.0
        %v386 = vmax.f32 %v356, 0.0
        %v387 = vmax.f32 %v357, 0.0
        %v388 = vmax.f32 %v358, 0.0
        %v389 = vmax.f32 %v359, 0.0
        %v390 = vmax.f32 %v360, 0.0
        %v391 = vmax.f32 %v361, 0.0
        %v392 = vmax.f32 %v362, 0.0
        %v393 = vmax.f32 %v363, 0.0
        %v394 = vmax.f32 %v364, 0.0
        %v395 = vmax.f32 %v365, 0.0
        %v396 = vmax.f32 %v366, 0.0
        %v397 = vmax.f32 %v367, 0.0
        %v398 = vld [vmem:[#allocation2] sm:$0xff]
        %vm399 = vcmask 261120
        %v400 = vsel %vm399, %v368, 0.0
        %v401 = vsel %vm399, %v369, 0.0
        %v402 = vadd.f32 %v400, %v401
        %v403 = vsel %vm399, %v370, 0.0
        %v404 = vadd.f32 %v402, %v403
        %v405 = vsel %vm399, %v371, 0.0
        %v406 = vadd.f32 %v404, %v405
        %v407 = vsel %vm399, %v372, 0.0
        %v408 = vadd.f32 %v406, %v407
        %v409 = vsel %vm399, %v373, 0.0
        %v410 = vadd.f32 %v408, %v409
        %v411 = vsel %vm399, %v374, 0.0
        %v412 = vadd.f32 %v410, %v411
        %v413 = vsel %vm399, %v375, 0.0
        %v414 = vadd.f32 %v412, %v413
        %v415 = vsel %vm399, %v376, 0.0
        %v416 = vadd.f32 %v414, %v415
        %v417 = vsel %vm399, %v377, 0.0
        %v418 = vadd.f32 %v416, %v417
        %v419 = vsel %vm399, %v378, 0.0
        %v420 = vadd.f32 %v418, %v419
        %v421 = vsel %vm399, %v379, 0.0
        %v422 = vadd.f32 %v420, %v421
        %v423 = vsel %vm399, %v380, 0.0
        %v424 = vadd.f32 %v422, %v423
        %v425 = vsel %vm399, %v381, 0.0
        %v426 = vadd.f32 %v424, %v425
        %v427 = vsel %vm399, %v382, 0.0
        %v428 = vadd.f32 %v426, %v427
        %v429 = vsel %vm399, %v383, 0.0
        %v430 = vadd.f32 %v428, %v429
        %v431 = vsel %vm399, %v384, 0.0
        %v432 = vadd.f32 %v430, %v431
        %v433 = vsel %vm399, %v385, 0.0
        %v434 = vadd.f32 %v432, %v433
        %v435 = vsel %vm399, %v386, 0.0
        %v436 = vadd.f32 %v434, %v435
        %v437 = vsel %vm399, %v387, 0.0
        %v438 = vadd.f32 %v436, %v437
        %v439 = vsel %vm399, %v388, 0.0
        %v440 = vadd.f32 %v438, %v439
        %v441 = vsel %vm399, %v389, 0.0
        %v442 = vadd.f32 %v440, %v441
        %v443 = vsel %vm399, %v390, 0.0
        %v444 = vadd.f32 %v442, %v443
        %v445 = vsel %vm399, %v391, 0.0
        %v446 = vadd.f32 %v444, %v445
        %v447 = vsel %vm399, %v392, 0.0
        %v448 = vadd.f32 %v446, %v447
        %v449 = vsel %vm399, %v393, 0.0
        %v450 = vadd.f32 %v448, %v449
        %v451 = vsel %vm399, %v394, 0.0
        %v452 = vadd.f32 %v450, %v451
        %v453 = vsel %vm399, %v395, 0.0
        %v454 = vadd.f32 %v452, %v453
        %v455 = vsel %vm399, %v396, 0.0
        %v456 = vadd.f32 %v454, %v455
        %v457 = vsel %vm399, %v397, 0.0
        %v458 = vadd.f32 %v456, %v457
        %v459 = vadd.f32 %v398, %v458
        %460 = vst.msk [vmem:[#allocation2] sm:$0xff] %vm399, %v459
        // Predicated region
        $region45: #{tpu_custom_call.1} parent=39 // pred_check
          %p461 = pneg %p265
        $region46: #{tpu_custom_call.1} parent=39 // pred_check_branch
          %463 = sbr.rel (%p461) target = $region48
        $region47: #{tpu_custom_call.1} parent=39 // pred_region
          %v464 = vld [vmem:[#allocation2] sm:$0xff]
          %v465 = vsel %vm399, %v464, 0.0
          %v466 = vrot.slane %v465, 4
          %v467 = vadd.f32 %v465, %v466
          %v468 = vrot.slane %v467, 2
          %v469 = vadd.f32 %v467, %v468
          %v470 = vrot.slane %v469, 1
          %v471 = vadd.f32 %v469, %v470
          %v472 = vld [vmem:[%s1] sm:$0x1]
          %v473 = vmax.f32 %v472, 0.0
          %v474 = vmul.f32 %v473, 15.0
          %v475 = vsub.f32 %v471, %v474
          %v476 = vmul.f32 %v475, 0.0044444446
          %v477 = vlaneseq
          %v478 = vshrl.u32 %v477, 7
          %v479 = vsub.s32 0, %v478
          %v480 = vrot.slane %v476, %v479
          %v481 = vld [vmem:[%s2] sm:$0xff]
          %v482 = vld [vmem:[%s2 + $0x8] sm:$0xff]
          %v483 = vld [vmem:[%s2 + $0x10] sm:$0xff]
          %v484 = vld [vmem:[%s2 + $0x18] sm:$0xff]
          %v485 = vld [vmem:[%s3] sm:$0x1]
          %v487 = vlaneseq
          %v488 = vshrl.u32 %v487, 7
          %v489 = vsub.s32 0, %v488
          %v490 = vrot.slane %v485, %v489
          %v493 = vsel %vm399, %v480, 0
          %495 = vmatprep.subr.mxu0 0.0
          %496 = vmatpush1.msra.mxu0 %v481
          %497 = vmatprep.subr.mxu0 0.0
          %498 = vmatpush1.msra.mxu0 %v482
          %499 = vmatprep.subr.mxu0 0.0
          %500 = vmatpush1.msra.mxu0 %v483
          %501 = vmatprep.subr.mxu0 0.0
          %502 = vmatpush1.msra.mxu0 %v484
          %503 = vmatprep.subr.mxu0 0.0
          %504 = vmatpush1.msra.mxu0 0.0
          %505 = vmatprep.subr.mxu0 0.0
          %506 = vmatpush1.msra.mxu0 0.0
          %507 = vmatprep.subr.mxu0 0.0
          %508 = vmatpush1.msra.mxu0 0.0
          %509 = vmatprep.subr.mxu0 0.0
          %510 = vmatpush1.msra.mxu0 0.0
          %511 = vmatprep.subr.mxu0 0.0
          %512 = vmatpush1.msra.mxu0 0.0
          %513 = vmatprep.subr.mxu0 0.0
          %514 = vmatpush1.msra.mxu0 0.0
          %515 = vmatprep.subr.mxu0 0.0
          %516 = vmatpush1.msra.mxu0 0.0
          %517 = vmatprep.subr.mxu0 0.0
          %518 = vmatpush1.msra.mxu0 0.0
          %519 = vmatprep.subr.mxu0 0.0
          %520 = vmatpush1.msra.mxu0 0.0
          %521 = vmatprep.subr.mxu0 0.0
          %522 = vmatpush1.msra.mxu0 0.0
          %523 = vmatprep.subr.mxu0 0.0
          %524 = vmatpush1.msra.mxu0 0.0
          %525 = vmatprep.subr.mxu0 0.0
          %526 = vmatpush1.msra.mxu0 0.0
          %527 = vmatprep.subr.mxu0 0.0
          %528 = vmatpush1.msra.mxu0 0.0
          %529 = vmatprep.subr.mxu0 0.0
          %530 = vmatpush1.msra.mxu0 0.0
          %531 = vmatprep.subr.mxu0 0.0
          %532 = vmatpush1.msra.mxu0 0.0
          %533 = vmatprep.subr.mxu0 0.0
          %534 = vmatpush1.msra.mxu0 0.0
          %535 = vmatprep.subr.mxu0 0.0
          %536 = vmatpush1.msra.mxu0 0.0
          %537 = vmatprep.subr.mxu0 0.0
          %538 = vmatpush1.msra.mxu0 0.0
          %539 = vmatprep.subr.mxu0 0.0
          %540 = vmatpush1.msra.mxu0 0.0
          %541 = vmatprep.subr.mxu0 0.0
          %542 = vmatpush1.msra.mxu0 0.0
          %543 = vmatprep.subr.mxu0 0.0
          %544 = vmatpush1.msra.mxu0 0.0
          %545 = vmatprep.subr.mxu0 0.0
          %546 = vmatpush1.msra.mxu0 0.0
          %547 = vmatprep.subr.mxu0 0.0
          %548 = vmatpush1.msra.mxu0 0.0
          %549 = vmatprep.subr.mxu0 0.0
          %550 = vmatpush1.msra.mxu0 0.0
          %551 = vmatprep.subr.mxu0 0.0
          %552 = vmatpush1.msra.mxu0 0.0
          %553 = vmatprep.subr.mxu0 0.0
          %554 = vmatpush1.msra.mxu0 0.0
          %555 = vmatprep.subr.mxu0 0.0
          %556 = vmatpush1.msra.mxu0 0.0
          %557 = vmatprep.subr.mxu0 0.0
          %558 = vmatpush1.msra.mxu0 0.0
          %559 = vmatprep.mubr.f32.mxu0 0.0
          %560 = vmatmul.mubr.f32.gmra.mrb[0].mxu0 %v493
          %v561 = vpop.f32.mrb[0].mxu0
          %v562 = vadd.f32 %v490, %v561
          %v563 = vpop.f32.mrb[0].mxu0
          %564 = vdwg.mxu0
          %v565 = vmax.f32 %v562, 0.0
          %v566 = vld [vmem:[%s264] sm:$0x1]
          %v568 = vlaneseq
          %v569 = vshrl.u32 %v568, 7
          %v570 = vsub.s32 0, %v569
          %v571 = vrot.slane %v566, %v570
          %v573 = vmul.f32 %v565, %v571
          %574 = vst [vmem:[%s251] sm:$0xff] %v573
        $region48: #{tpu_custom_call.1} parent=39 // pred_fallthru
          _
        %s575 = sand.u32 %s156, 1
        %s576 = scalar_lea.sflag [#allocation4], %s575
        %s577 = sand.u32 %s156, 1
        %s578 = smul.addr %s577, 8
        %s579 = scalar_lea.vmem [#allocation3], %s578
        // Predicated region
        $region49: #{tpu_custom_call.1} parent=39 // pred_check
          %p580 = pneg %p166
        $region50: #{tpu_custom_call.1} parent=39 // pred_check_branch
          %582 = sbr.rel (%p580) target = $region52
        $region51: #{tpu_custom_call.1} parent=39 // pred_region
          %s584 = ssub.s32 128, 128
          %585 = vsyncadd %s576, %s584
          %s586 = smul.addr %s23, 128
          %s587 = scalar_lea.hbm %s5, %s586
          %s589 = sshll.u32 %s579, 4
          %s590 = int_to_ptr.vmem [resolvable:$true] %s589
          %592 = dma.vmem_to_hbm [thread:$0]  %s590, 128, %s587, %s576
        $region52: #{tpu_custom_call.1} parent=39 // pred_fallthru
          _
      $region40: #{tpu_custom_call.1} parent=5 // pred_fallthru
        _
      %p593 = scmp.le.s32.totalorder 2, %s14
      // Predicated region
      $region53: #{tpu_custom_call.1} parent=5 // pred_check
        %p594 = pneg %p593
      $region54: #{tpu_custom_call.1} parent=5 // pred_check_branch
        %596 = sbr.rel (%p594) target = $region56
      $region55: #{tpu_custom_call.1} parent=5 // pred_region
        %s597 = ssub.s32 %s14, 2
        // Predicated region
        $region57: #{tpu_custom_call.1} parent=55 // pred_check
          %p598 = pneg %p172
        $region58: #{tpu_custom_call.1} parent=55 // pred_check_branch
          %600 = sbr.rel (%p598) target = $region60
        $region59: #{tpu_custom_call.1} parent=55 // pred_region
          %s601 = sand.u32 %s157, 1
          %s602 = scalar_lea.sflag [#allocation4], %s601
          %s603 = sand.u32 %s157, 1
          %s604 = smul.addr %s603, 8
          %s605 = scalar_lea.vmem [#allocation3], %s604
          %606 = dma.done %s602, 128
        $region60: #{tpu_custom_call.1} parent=55 // pred_fallthru
          _
      $region56: #{tpu_custom_call.1} parent=5 // pred_fallthru
        _
    $region6: #{tpu_custom_call.1} parent=1 // loop_footer
      %s18 = sadd.s32 1, %s14
    $region7: #{tpu_custom_call.1} parent=1 // loop_footer_branch
      %13 = sbr.rel target = $region3
    $region8: #{tpu_custom_call.1} parent=1 // loop_exit
      _
    %607 = vsyncpa [#allocation4], 1
    %s608 = scalar_lea.sflag [#allocation4], 1
    %609 = vsyncpa %s608, 1

</llo_original>
